<compile_context>
chip_gen: v5e
topology: v5e:2x2
jax: 0.10.0
libtpu: 0.0.40
codegen_flags: <defaults>
</compile_context>

<pallas_src>
import functools
import math

import jax
import jax.numpy as jnp
from jax import lax
from jax.experimental import pallas as pl
from jax.experimental.pallas import tpu as pltpu

_LOG_CLAMP = -100.0  # torch's binary_cross_entropy clamps log terms at -100


def _bce_softmax_kernel(logits_ref, targets_ref, out_ref, *,
                        num_positions, tile_positions, mask_tail):
    """One (batch, position-tile) step.

    logits_ref : (C, T) block -- classes on sublanes, positions on lanes.
    targets_ref: (1, T) int32 class ids.
    out_ref    : (1, 1) partial sum of the elementwise BCE over this tile.
    """
    x = logits_ref[...].astype(jnp.float32)        # (C, T)
    t = targets_ref[...]                           # (1, T) int32

    # Numerically stable softmax pieces over the class (sublane) axis.
    m = jnp.max(x, axis=0, keepdims=True)          # (1, T)
    e = jnp.exp(x - m)                             # (C, T)  -- 1 EUP op / elem
    s = jnp.sum(e, axis=0, keepdims=True)          # (1, T)
    log_s = jnp.log(s)                             # (1, T)

    # log p_i       = (x_i - m) - log s
    # log (1 - p_i) = log(s - e_i) - log s     (no second exp per element)
    # Both clamped at -100 like PyTorch (avoids -inf propagating into the sum).
    log_p = jnp.maximum((x - m) - log_s, _LOG_CLAMP)                     # (C, T)
    log_1mp = jnp.maximum(jnp.log(jnp.maximum(s - e, 0.0)) - log_s,
                          _LOG_CLAMP)                                    # (C, T)

    cls = lax.broadcasted_iota(jnp.int32, x.shape, 0)   # (C, T) class index
    elem = -jnp.where(cls == t, log_p, log_1mp)         # (C, T)

    if mask_tail:
        # Ragged last tile: zero out positions past the true extent (select,
        # so garbage/NaN from out-of-bounds reads never propagates).
        j = pl.program_id(1)
        pos = j * tile_positions + lax.broadcasted_iota(
            jnp.int32, (1, tile_positions), 1)
        elem = jnp.where(pos < num_positions, elem, 0.0)

    out_ref[...] = jnp.sum(elem, keepdims=True)          # (1, 1) partial sum


@jax.jit
def bce_softmax_loss(logits, targets):
    """mean(BCE(softmax(logits, axis=1), one_hot(targets))) for
    logits (N, C, *spatial) and targets (N, *spatial) -- matches the PyTorch
    BCELoss module's forward."""
    n, c = logits.shape[0], logits.shape[1]
    hw = math.prod(logits.shape[2:])

    logits3 = logits.reshape(n, c, hw)                      # free reshape of NCHW
    targets3 = targets.reshape(n, 1, hw).astype(jnp.int32)  # free reshape

    # Position tile: multiple of 128 lanes, ~4 MiB of f32 logits per block.
    block_bytes = 4 * 1024 * 1024
    max_tile = max(128, (block_bytes // (c * 4)) // 128 * 128)
    if hw <= max_tile:
        # Single full-extent tile: always a legal block shape, no masking.
        tile_positions = hw
        num_tiles = 1
        mask_tail = False
    else:
        tile_positions = max_tile
        num_tiles = pl.cdiv(hw, tile_positions)
        mask_tail = (hw % tile_positions) != 0

    kernel = functools.partial(
        _bce_softmax_kernel,
        num_positions=hw,
        tile_positions=tile_positions,
        mask_tail=mask_tail,
    )

    partials = pl.pallas_call(
        kernel,
        out_shape=jax.ShapeDtypeStruct((n, num_tiles, 1, 1), jnp.float32),
        grid_spec=pltpu.PrefetchScalarGridSpec(
            num_scalar_prefetch=0,
            grid=(n, num_tiles),
            in_specs=[
                pl.BlockSpec((None, c, tile_positions), lambda i, j: (i, 0, j)),
                pl.BlockSpec((None, 1, tile_positions), lambda i, j: (i, 0, j)),
            ],
            out_specs=pl.BlockSpec((None, None, 1, 1),
                                   lambda i, j: (i, j, 0, 0)),
        ),
        compiler_params=pltpu.CompilerParams(
            # Independent grid steps -> both axes parallel (megacore on v7x).
            dimension_semantics=("parallel", "parallel"),
            # 2 inputs x 2 buffers x ~(4 + 4/C) MiB stays well under this and
            # under v7x's 64 MiB physical VMEM.
            vmem_limit_bytes=32 * 1024 * 1024,
        ),
    )(logits3, targets3)

    return jnp.sum(partials) / jnp.float32(n * c * hw)


def _reference_bce(logits, targets):
    """Pure-JAX mirror of the PyTorch module (for correctness checking)."""
    c = logits.shape[1]
    log_p = jax.nn.log_softmax(logits.astype(jnp.float32), axis=1)
    p = jnp.exp(log_p)
    one_hot = jax.nn.one_hot(targets, c, axis=1, dtype=jnp.float32)
    lp = jnp.maximum(jnp.log(p), _LOG_CLAMP)
    l1 = jnp.maximum(jnp.log(1.0 - p), _LOG_CLAMP)
    return jnp.mean(-(one_hot * lp + (1.0 - one_hot) * l1))


if __name__ == "__main__":
    key = jax.random.PRNGKey(0)

    # Primary shape: lane-aligned spatial extent.
    n, c, h, w = 2, 4, 16, 16
    k_logits, k_targets, key = jax.random.split(key, 3)
    logits = jax.random.normal(k_logits, (n, c, h, w), dtype=jnp.float32)
    targets = jax.random.randint(k_targets, (n, h, w), 0, c, dtype=jnp.int32)

    loss = bce_softmax_loss(logits, targets)
    jax.block_until_ready(loss)
    ref = _reference_bce(logits, targets)
    assert jnp.allclose(loss, ref, atol=1e-5, rtol=1e-5), (loss, ref)

    # Secondary shape: odd class count / non-128-multiple spatial extent
    # (exercises the full-extent-tile path).
    n2, c2, h2, w2 = 2, 3, 5, 7
    k_logits2, k_targets2, key = jax.random.split(key, 3)
    logits2 = jax.random.normal(k_logits2, (n2, c2, h2, w2), dtype=jnp.float32)
    targets2 = jax.random.randint(k_targets2, (n2, h2, w2), 0, c2,
                                  dtype=jnp.int32)

    loss2 = bce_softmax_loss(logits2, targets2)
    jax.block_until_ready(loss2)
    ref2 = _reference_bce(logits2, targets2)
    assert jnp.allclose(loss2, ref2, atol=1e-5, rtol=1e-5), (loss2, ref2)

    print("KERNEL_OK")
</pallas_src>

<mosaic_0001>
module attributes {stable_mosaic.version = 11 : i64} {
  func.func @_bce_softmax_kernel(%arg0: i32, %arg1: i32, %arg2: memref<1x4x256xf32, #tpu.memory_space<vmem>>, %arg3: memref<1x1x256xi32, #tpu.memory_space<vmem>>, %arg4: memref<1x1x1x1xf32, #tpu.memory_space<vmem>>) attributes {dimension_semantics = [#tpu.dimension_semantics<parallel>, #tpu.dimension_semantics<parallel>], iteration_bounds = array<i64: 2, 1>, scalar_prefetch = 0 : i64, scratch_operands = 0 : i64, tpu.core_type = #tpu.core_type<tc>, window_params = [{transform_indices = @transform_0, window_bounds = array<i64: 1, 4, 256>}, {transform_indices = @transform_1, window_bounds = array<i64: 1, 1, 256>}, {transform_indices = @transform_2, window_bounds = array<i64: 1, 1, 1, 1>}]} {
    %c0 = arith.constant 0 : index
    %c0_0 = arith.constant 0 : index
    %c0_1 = arith.constant 0 : index
    %0 = vector.load %arg2[%c0, %c0_0, %c0_1] : memref<1x4x256xf32, #tpu.memory_space<vmem>>, vector<1x4x256xf32>
    %1 = vector.shape_cast %0 : vector<1x4x256xf32> to vector<4x256xf32>
    %c0_2 = arith.constant 0 : index
    %c0_3 = arith.constant 0 : index
    %c0_4 = arith.constant 0 : index
    %2 = vector.load %arg3[%c0_2, %c0_3, %c0_4] : memref<1x1x256xi32, #tpu.memory_space<vmem>>, vector<1x1x256xi32>
    %3 = vector.shape_cast %2 : vector<1x1x256xi32> to vector<1x256xi32>
    %cst = arith.constant dense<0xFF800000> : vector<256xf32>
    %4 = vector.multi_reduction <maximumf>, %1, %cst [0] : vector<4x256xf32> to vector<256xf32>
    %5 = vector.shape_cast %4 : vector<256xf32> to vector<1x256xf32>
    %6 = vector.broadcast %5 : vector<1x256xf32> to vector<4x256xf32>
    %7 = arith.subf %1, %6 : vector<4x256xf32>
    %8 = math.exp %7 : vector<4x256xf32>
    %cst_5 = arith.constant dense<0.000000e+00> : vector<256xf32>
    %9 = vector.multi_reduction <add>, %8, %cst_5 [0] : vector<4x256xf32> to vector<256xf32>
    %10 = vector.shape_cast %9 : vector<256xf32> to vector<1x256xf32>
    %11 = math.log %10 : vector<1x256xf32>
    %12 = vector.broadcast %5 : vector<1x256xf32> to vector<4x256xf32>
    %13 = arith.subf %1, %12 : vector<4x256xf32>
    %14 = vector.broadcast %11 : vector<1x256xf32> to vector<4x256xf32>
    %15 = arith.subf %13, %14 : vector<4x256xf32>
    %cst_6 = arith.constant -1.000000e+02 : f32
    %16 = vector.broadcast %cst_6 : f32 to vector<4x256xf32>
    %17 = arith.maximumf %15, %16 : vector<4x256xf32>
    %18 = vector.broadcast %10 : vector<1x256xf32> to vector<4x256xf32>
    %19 = arith.subf %18, %8 : vector<4x256xf32>
    %cst_7 = arith.constant 0.000000e+00 : f32
    %20 = vector.broadcast %cst_7 : f32 to vector<4x256xf32>
    %21 = arith.maximumf %19, %20 : vector<4x256xf32>
    %22 = math.log %21 : vector<4x256xf32>
    %23 = vector.broadcast %11 : vector<1x256xf32> to vector<4x256xf32>
    %24 = arith.subf %22, %23 : vector<4x256xf32>
    %cst_8 = arith.constant -1.000000e+02 : f32
    %25 = vector.broadcast %cst_8 : f32 to vector<4x256xf32>
    %26 = arith.maximumf %24, %25 : vector<4x256xf32>
    %27 = tpu.iota {dimensions = array<i32: 0>} : vector<4x256xi32>
    %28 = vector.broadcast %3 : vector<1x256xi32> to vector<4x256xi32>
    %29 = arith.cmpi eq, %27, %28 : vector<4x256xi32>
    %30 = arith.select %29, %17, %26 : vector<4x256xi1>, vector<4x256xf32>
    %cst_9 = arith.constant 0.000000e+00 : f32
    %31 = vector.broadcast %cst_9 : f32 to vector<4x256xf32>
    %32 = arith.subf %31, %30 : vector<4x256xf32>
    %33 = vector.shape_cast %32 : vector<4x256xf32> to vector<1x4x256xf32>
    %cst_10 = arith.constant dense<0.000000e+00> : vector<1xf32>
    %34 = vector.multi_reduction <add>, %33, %cst_10 [1, 2] : vector<1x4x256xf32> to vector<1xf32>
    %35 = vector.shape_cast %34 : vector<1xf32> to vector<1x1x1xf32>
    %36 = vector.extract %35[0, 0, 0] : f32 from vector<1x1x1xf32>
    %37 = vector.broadcast %36 : f32 to vector<1x1xf32>
    %c0_11 = arith.constant 0 : index
    %c0_12 = arith.constant 0 : index
    %c0_13 = arith.constant 0 : index
    %c0_14 = arith.constant 0 : index
    %38 = vector.load %arg4[%c0_11, %c0_12, %c0_13, %c0_14] : memref<1x1x1x1xf32, #tpu.memory_space<vmem>>, vector<1x1x1x1xf32>
    %39 = vector.shape_cast %38 : vector<1x1x1x1xf32> to vector<1x1xf32>
    %40 = vector.shape_cast %37 : vector<1x1xf32> to vector<1x1x1x1xf32>
    tpu.vector_store %arg4[%c0_11, %c0_12, %c0_13, %c0_14], %40 {strides = array<i32>} : memref<1x1x1x1xf32, #tpu.memory_space<vmem>>, vector<1x1x1x1xf32>,
    return
  }
  func.func @transform_0(%arg0: i32, %arg1: i32) -> (i32, i32, i32) {
    %c0_i32 = arith.constant 0 : i32
    %c0_i32_0 = arith.constant 0 : i32
    return %arg0, %c0_i32, %arg1 : i32, i32, i32
  }
  func.func @transform_1(%arg0: i32, %arg1: i32) -> (i32, i32, i32) {
    %c0_i32 = arith.constant 0 : i32
    %c0_i32_0 = arith.constant 0 : i32
    return %arg0, %c0_i32, %arg1 : i32, i32, i32
  }
  func.func @transform_2(%arg0: i32, %arg1: i32) -> (i32, i32, i32, i32) {
    %c0_i32 = arith.constant 0 : i32
    %c0_i32_0 = arith.constant 0 : i32
    %c0_i32_1 = arith.constant 0 : i32
    return %arg0, %arg1, %c0_i32, %c0_i32_0 : i32, i32, i32, i32
  }
}

</mosaic_0001>

<llo_original>
// kernel: bce_softmax_loss.1
$region0: #{bce_softmax_loss.1}
  #allocation0 [shape = 'u32[]', space=smem, size = 0x4, offset = 0x4, fixed_abs, tag = 'smem constant byte address 0x4 - core index']
  #allocation1 [shape = 'u32[72,128]{1,0:T(1,128)}', space=vmem, size = 0x9000, scoped, tag = 'internal scratch']
  %s0 = inlined_call_operand.vmem [shape: f32[2,4,256], index: 0, kind: input, shape index: {}]
  %s1 = inlined_call_operand.vmem [shape: s32[2,1,256], index: 1, kind: input, shape index: {}]
  %s2 = inlined_call_operand.vmem [shape: f32[2,1,1,1], index: 2, kind: output, shape index: {}]
  %s3 = sld [smem:[#allocation0]]
  $region41: #{bce_softmax_loss.1} parent=0
    _
  %s5 = ssub.s32 1, %s3
  %s6 = scalar_select 0, %s5, %s3
  loop: start=0, step=1, limit=4
  $region2: #{bce_softmax_loss.1} parent=0 // loop_pre_header
    _
  $region3: #{bce_softmax_loss.1} parent=0 // loop_header
    %s8 = sphi 0, %s12
    %p9 = scmp.ge.s32.totalorder %s8, 4
    %s15 = sphi 0, %s27
    %s16 = sphi 0, %s23
    %s17 = sphi 0, %s15
    %s18 = sphi 0, %s16
    %s19 = sphi 0, %s17
    %s20 = sphi 0, %s18
    %s32 = sphi 0, %s34
    %s35 = sphi 0, %s32
    %s36 = sphi 0, %s35
    %s52 = sphi 0, %s36
    %s60 = sphi 0, %s62
    %s63 = sphi 0, %s60
    %s64 = sphi 0, %s63
    %s80 = sphi 0, %s64
    %s88 = sphi 0, %s90
    %s91 = sphi 0, %s88
    %s92 = sphi 0, %s91
    %s108 = sphi 0, %s92
  $region4: #{bce_softmax_loss.1} parent=0 // loop_header_branch
    %11 = sbr.rel (%p9) target = $region8
  $region5: #{bce_softmax_loss.1} parent=0 // loop_body
    %s13 = ssub.s32 %s8, 1
    %s14 = ssub.s32 %s8, 2
    %s21 = sadd.s32 1, %s16
    %p22 = scmp.ge.s32.totalorder %s21, 1
    %s23 = scalar_select %p22, 0, %s21
    %s24 = sadd.s32 1, %s15
    %s25 = scalar_select %p22, %s24, %s15
    %p26 = scmp.ge.s32.totalorder %s25, 2
    %s27 = scalar_select %p26, 0, %s25
    %s28 = ssub.s32 %s15, %s27
    %s29 = ssub.s32 %s16, %s23
    %s30 = sor.u32 %s28, %s29
    %p31 = scmp.eq.s32.totalorder %s30, 0
    %s33 = sadd.s32 %s32, 1
    %s34 = scalar_select %p31, %s32, %s33
    %p37 = pneg %p31
    %p38 = scmp.eq.s32.totalorder %s8, 1
    %p39 = por %p37, %p38
    %p40 = scmp.ne.s32.totalorder %s32, %s35
    %p41 = scmp.eq.s32.totalorder %s8, 0
    %p42 = por %p40, %p41
    %p43 = scmp.ne.s32.totalorder %s32, %s35
    %p44 = scmp.eq.s32.totalorder %s13, 1
    %p45 = por %p43, %p44
    %p46 = scmp.ne.s32.totalorder %s35, %s36
    %p47 = scmp.eq.s32.totalorder %s13, 0
    %p48 = por %p46, %p47
    %p49 = scmp.ne.s32.totalorder %s35, %s36
    %p50 = scmp.eq.s32.totalorder %s14, 1
    %p51 = por %p49, %p50
    %p53 = scmp.ne.s32.totalorder %s36, %s52
    %p54 = scmp.eq.s32.totalorder %s14, 0
    %p55 = por %p53, %p54
    %s56 = ssub.s32 %s15, %s27
    %s57 = ssub.s32 %s16, %s23
    %s58 = sor.u32 %s56, %s57
    %p59 = scmp.eq.s32.totalorder %s58, 0
    %s61 = sadd.s32 %s60, 1
    %s62 = scalar_select %p59, %s60, %s61
    %p65 = pneg %p59
    %p66 = scmp.eq.s32.totalorder %s8, 1
    %p67 = por %p65, %p66
    %p68 = scmp.ne.s32.totalorder %s60, %s63
    %p69 = scmp.eq.s32.totalorder %s8, 0
    %p70 = por %p68, %p69
    %p71 = scmp.ne.s32.totalorder %s60, %s63
    %p72 = scmp.eq.s32.totalorder %s13, 1
    %p73 = por %p71, %p72
    %p74 = scmp.ne.s32.totalorder %s63, %s64
    %p75 = scmp.eq.s32.totalorder %s13, 0
    %p76 = por %p74, %p75
    %p77 = scmp.ne.s32.totalorder %s63, %s64
    %p78 = scmp.eq.s32.totalorder %s14, 1
    %p79 = por %p77, %p78
    %p81 = scmp.ne.s32.totalorder %s64, %s80
    %p82 = scmp.eq.s32.totalorder %s14, 0
    %p83 = por %p81, %p82
    %s84 = ssub.s32 %s15, %s27
    %s85 = ssub.s32 %s16, %s23
    %s86 = sor.u32 %s84, %s85
    %p87 = scmp.eq.s32.totalorder %s86, 0
    %s89 = sadd.s32 %s88, 1
    %s90 = scalar_select %p87, %s88, %s89
    %p93 = pneg %p87
    %p94 = scmp.eq.s32.totalorder %s8, 1
    %p95 = por %p93, %p94
    %p96 = scmp.ne.s32.totalorder %s88, %s91
    %p97 = scmp.eq.s32.totalorder %s8, 0
    %p98 = por %p96, %p97
    %p99 = scmp.ne.s32.totalorder %s88, %s91
    %p100 = scmp.eq.s32.totalorder %s13, 1
    %p101 = por %p99, %p100
    %p102 = scmp.ne.s32.totalorder %s91, %s92
    %p103 = scmp.eq.s32.totalorder %s13, 0
    %p104 = por %p102, %p103
    %p105 = scmp.ne.s32.totalorder %s91, %s92
    %p106 = scmp.eq.s32.totalorder %s14, 1
    %p107 = por %p105, %p106
    %p109 = scmp.ne.s32.totalorder %s92, %s108
    %p110 = scmp.eq.s32.totalorder %s14, 0
    %p111 = por %p109, %p110
    %p112 = scmp.le.s32.totalorder 1, %s8
    %p113 = scmp.lt.s32.totalorder %s8, 3
    %p114 = pnand %p112, %p113
    %p115 = pneg %p114
    // Predicated region
    $region9: #{bce_softmax_loss.1} parent=5 // pred_check
      _
    $region10: #{bce_softmax_loss.1} parent=5 // pred_check_branch
      %117 = sbr.rel (%p114) target = $region12
    $region11: #{bce_softmax_loss.1} parent=5 // pred_region
      %s118 = ssub.s32 %s8, 1
    $region12: #{bce_softmax_loss.1} parent=5 // pred_fallthru
      _
    %p119 = scmp.lt.s32.totalorder %s8, 2
    // Predicated region
    $region13: #{bce_softmax_loss.1} parent=5 // pred_check
      %p120 = pneg %p119
    $region14: #{bce_softmax_loss.1} parent=5 // pred_check_branch
      %122 = sbr.rel (%p120) target = $region16
    $region15: #{bce_softmax_loss.1} parent=5 // pred_region
      // Predicated region
      $region17: #{bce_softmax_loss.1} parent=15 // pred_check
        %p123 = pneg %p42
      $region18: #{bce_softmax_loss.1} parent=15 // pred_check_branch
        %125 = sbr.rel (%p123) target = $region20
      $region19: #{bce_softmax_loss.1} parent=15 // pred_region
        %s126 = smul.u32 2, %s16
        %p127 = scmp.lt.s32.totalorder %s15, 1
        %s128 = scalar_select %p127, %s15, 1
        %p129 = scmp.lt.s32.totalorder %s126, 1
        %s130 = scalar_select %p129, %s126, 1
        %s131 = smul.addr %s128, 2
        %s132 = sadd.s32 %s130, %s131
        %s133 = smul.addr %s132, 4
        %s134 = scalar_lea.vmem %s0, %s133
        %s135 = smul.u32 2, %s16
      $region20: #{bce_softmax_loss.1} parent=15 // pred_fallthru
        _
      // Predicated region
      $region21: #{bce_softmax_loss.1} parent=15 // pred_check
        %p136 = pneg %p70
      $region22: #{bce_softmax_loss.1} parent=15 // pred_check_branch
        %138 = sbr.rel (%p136) target = $region24
      $region23: #{bce_softmax_loss.1} parent=15 // pred_region
        %s139 = smul.u32 2, %s16
        %p140 = scmp.lt.s32.totalorder %s15, 1
        %s141 = scalar_select %p140, %s15, 1
        %p142 = scmp.lt.s32.totalorder %s139, 1
        %s143 = scalar_select %p142, %s139, 1
        %s144 = smul.addr %s141, 2
        %s145 = sadd.s32 %s143, %s144
        %s146 = scalar_lea.vmem %s1, %s145
        %s147 = smul.u32 2, %s16
      $region24: #{bce_softmax_loss.1} parent=15 // pred_fallthru
        _
    $region16: #{bce_softmax_loss.1} parent=5 // pred_fallthru
      _
    %p148 = scmp.le.s32.totalorder 1, %s8
    %p149 = scmp.lt.s32.totalorder %s8, 3
    %p150 = pnand %p148, %p149
    %p151 = pneg %p150
    // Predicated region
    $region25: #{bce_softmax_loss.1} parent=5 // pred_check
      _
    $region26: #{bce_softmax_loss.1} parent=5 // pred_check_branch
      %153 = sbr.rel (%p150) target = $region28
    $region27: #{bce_softmax_loss.1} parent=5 // pred_region
      %s154 = ssub.s32 %s8, 1
      %s155 = smul.u32 2, %s18
      %p156 = scmp.lt.s32.totalorder %s17, 1
      %s157 = scalar_select %p156, %s17, 1
      %p158 = scmp.lt.s32.totalorder %s155, 1
      %s159 = scalar_select %p158, %s155, 1
      %s160 = smul.addr %s157, 2
      %s161 = sadd.s32 %s159, %s160
      %s162 = smul.addr %s161, 4
      %s163 = scalar_lea.vmem %s0, %s162
      %p164 = pneg %p48
      %p165 = pneg %p45
      %s166 = smul.u32 2, %s18
      %p167 = scmp.lt.s32.totalorder %s17, 1
      %s168 = scalar_select %p167, %s17, 1
      %p169 = scmp.lt.s32.totalorder %s166, 1
      %s170 = scalar_select %p169, %s166, 1
      %s171 = smul.addr %s168, 2
      %s172 = sadd.s32 %s170, %s171
      %s173 = scalar_lea.vmem %s1, %s172
      %p174 = pneg %p76
      %p175 = pneg %p73
      %p176 = pneg %p104
      %p177 = pneg %p101
      %p178 = scmp.lt.s32.totalorder %s17, 1
      %s179 = scalar_select %p178, %s17, 1
      %p180 = scmp.lt.s32.totalorder %s18, 0
      %s181 = scalar_select %p180, %s18, 0
      %s182 = sadd.s32 %s181, %s179
      %s183 = scalar_lea.vmem %s2, %s182
      %s184 = smul.u32 2, %s18
      %p185 = scmp.lt.s32.totalorder %s17, 1
      %s186 = scalar_select %p185, %s17, 1
      %p187 = scmp.lt.s32.totalorder %s184, 1
      %s188 = scalar_select %p187, %s184, 1
      %s189 = smul.addr %s186, 2
      %s190 = sadd.s32 %s188, %s189
      %s191 = smul.addr %s190, 4
      %s192 = scalar_lea.vmem %s0, %s191
      %s193 = smul.u32 2, %s18
      %s194 = smul.u32 2, %s18
      %p195 = scmp.lt.s32.totalorder %s17, 1
      %s196 = scalar_select %p195, %s17, 1
      %p197 = scmp.lt.s32.totalorder %s194, 1
      %s198 = scalar_select %p197, %s194, 1
      %s199 = smul.addr %s196, 2
      %s200 = sadd.s32 %s198, %s199
      %s201 = scalar_lea.vmem %s1, %s200
      %s202 = smul.u32 2, %s18
      %p203 = scmp.lt.s32.totalorder %s17, 1
      %s204 = scalar_select %p203, %s17, 1
      %p205 = scmp.lt.s32.totalorder %s18, 0
      %s206 = scalar_select %p205, %s18, 0
      %s207 = sadd.s32 %s206, %s204
      %s208 = scalar_lea.vmem %s2, %s207
      %v209 = vld [vmem:[%s192] sm:$0xff]
      %v210 = vld [vmem:[%s201] sm:$0x3]
      %212 = vst [vmem:[#allocation1] ss:$2 sm:$0xff] %v209
      %v213 = vld.sshfl [vmem:[#allocation1] sm:$0xff pattern:$0x75316420]
      %v214 = vld.sshfl [vmem:[#allocation1 + $0x8] sm:$0xff pattern:$0x75316420]
      %vm217 = vcmask 1043456
      %v218 = vsel %vm217, %v213, -inf
      %v219 = vrot.slane %v218, 4
      %v220 = vmax.f32 %v218, %v219
      %v221 = vrot.slane %v220, 2
      %v222 = vmax.f32 %v220, %v221
      %v223 = vrot.slane %v222, 1
      %v224 = vmax.f32 %v222, %v223
      %v225 = vsel %vm217, %v214, -inf
      %v226 = vrot.slane %v225, 4
      %v227 = vmax.f32 %v225, %v226
      %v228 = vrot.slane %v227, 2
      %v229 = vmax.f32 %v227, %v228
      %v230 = vrot.slane %v229, 1
      %v231 = vmax.f32 %v229, %v230
      %v234 = vrot.slane %v231, 4
      %v235 = vsel %vm217, %v224, %v234
      %v237 = vsub.f32 %v209, %v235
      %v238 = vmul.f32 %v237, 1.442695
      %v239 = vpow.pop %v238
      %241 = vst [vmem:[#allocation1] ss:$2 sm:$0xff] %v239
      %v242 = vld.sshfl [vmem:[#allocation1] sm:$0xff pattern:$0x75316420]
      %v243 = vld.sshfl [vmem:[#allocation1 + $0x8] sm:$0xff pattern:$0x75316420]
      %v246 = vsel %vm217, %v242, 0.0
      %v247 = vrot.slane %v246, 4
      %v248 = vadd.f32 %v246, %v247
      %v249 = vrot.slane %v248, 2
      %v250 = vadd.f32 %v248, %v249
      %v251 = vrot.slane %v250, 1
      %v252 = vadd.f32 %v250, %v251
      %v253 = vsel %vm217, %v243, 0.0
      %v254 = vrot.slane %v253, 4
      %v255 = vadd.f32 %v253, %v254
      %v256 = vrot.slane %v255, 2
      %v257 = vadd.f32 %v255, %v256
      %v258 = vrot.slane %v257, 1
      %v259 = vadd.f32 %v257, %v258
      %v260 = vlog2.pop %v252
      %v261 = vmul.f32 %v260, 0.6931472
      %v262 = vlog2.pop %v259
      %v263 = vmul.f32 %v262, 0.6931472
      %v266 = vrot.slane %v263, 4
      %v267 = vsel %vm217, %v261, %v266
      %v269 = vsub.f32 %v237, %v267
      %v270 = vmax.f32 %v269, -100.0
      %271 = vst [vmem:[#allocation1] ss:$2 sm:$0xff] %v239
      %v272 = vld.sshfl [vmem:[#allocation1] sm:$0xff pattern:$0x75316420]
      %v273 = vld.sshfl [vmem:[#allocation1 + $0x8] sm:$0xff pattern:$0x75316420]
      %v276 = vsub.f32 %v252, %v272
      %v277 = vsub.f32 %v259, %v273
      %v278 = vmax.f32 %v276, 0.0
      %v279 = vmax.f32 %v277, 0.0
      %v280 = vlog2.pop %v278
      %v281 = vmul.f32 %v280, 0.6931472
      %v282 = vlog2.pop %v279
      %v283 = vmul.f32 %v282, 0.6931472
      %v284 = vsub.f32 %v281, %v261
      %v285 = vsub.f32 %v283, %v263
      %v286 = vmax.f32 %v284, -100.0
      %v287 = vmax.f32 %v285, -100.0
      %v288 = vlaneseq
      %v289 = vshrl.u32 %v288, 7
      %v290 = vperm.slane %v210, 0
      %v291 = vperm.slane %v210, 1
      %vm292 = vcmp.eq.s32.totalorder %v289, %v290
      %vm293 = vcmp.eq.s32.totalorder %v289, %v291
      %295 = vst [vmem:[#allocation1] ss:$2 sm:$0xff] %v270
      %v296 = vld.sshfl [vmem:[#allocation1] sm:$0xff pattern:$0x75316420]
      %v297 = vld.sshfl [vmem:[#allocation1 + $0x8] sm:$0xff pattern:$0x75316420]
      %v300 = vsel %vm292, %v296, %v286
      %v301 = vsel %vm293, %v297, %v287
      %v302 = vsub.f32 0.0, %v300
      %v303 = vsub.f32 0.0, %v301
      %v304 = vsel %vm217, %v302, 0.0
      %v305 = vsel %vm217, %v303, 0.0
      %v306 = vadd.f32 %v304, %v305
      %307 = vadd.xlane.f32.xlu0 %v306
      %v308 = vpop.xlane.xlu0 %307
      %v309 = vrot.slane %v308, 4
      %v310 = vadd.f32 %v308, %v309
      %v311 = vrot.slane %v310, 2
      %v312 = vadd.f32 %v310, %v311
      %v313 = vrot.slane %v312, 1
      %v314 = vadd.f32 %v312, %v313
      %s315 = vtos %v314
      %v316 = vstv %s315
      %vm317 = vcmask 0
      %318 = vst.msk [vmem:[%s208] sm:$0x1] %vm317, %v316
      %p319 = scmp.lt.s32.totalorder %s17, 1
      %s320 = scalar_select %p319, %s17, 1
      %p321 = scmp.lt.s32.totalorder %s18, 0
      %s322 = scalar_select %p321, %s18, 0
      %s323 = sadd.s32 %s322, %s320
      %s324 = scalar_lea.vmem %s2, %s323
      // Predicated region
      $region29: #{bce_softmax_loss.1} parent=27 // pred_check
        %p325 = pneg %p101
      $region30: #{bce_softmax_loss.1} parent=27 // pred_check_branch
        %327 = sbr.rel (%p325) target = $region32
      $region31: #{bce_softmax_loss.1} parent=27 // pred_region
        _
      $region32: #{bce_softmax_loss.1} parent=27 // pred_fallthru
        _
    $region28: #{bce_softmax_loss.1} parent=5 // pred_fallthru
      _
    %p328 = scmp.le.s32.totalorder 2, %s8
    // Predicated region
    $region33: #{bce_softmax_loss.1} parent=5 // pred_check
      %p329 = pneg %p328
    $region34: #{bce_softmax_loss.1} parent=5 // pred_check_branch
      %331 = sbr.rel (%p329) target = $region36
    $region35: #{bce_softmax_loss.1} parent=5 // pred_region
      %s332 = ssub.s32 %s8, 2
      // Predicated region
      $region37: #{bce_softmax_loss.1} parent=35 // pred_check
        %p333 = pneg %p107
      $region38: #{bce_softmax_loss.1} parent=35 // pred_check_branch
        %335 = sbr.rel (%p333) target = $region40
      $region39: #{bce_softmax_loss.1} parent=35 // pred_region
        %p336 = scmp.lt.s32.totalorder %s19, 1
        %s337 = scalar_select %p336, %s19, 1
        %p338 = scmp.lt.s32.totalorder %s20, 0
        %s339 = scalar_select %p338, %s20, 0
        %s340 = sadd.s32 %s339, %s337
        %s341 = scalar_lea.vmem %s2, %s340
      $region40: #{bce_softmax_loss.1} parent=35 // pred_fallthru
        _
    $region36: #{bce_softmax_loss.1} parent=5 // pred_fallthru
      _
  $region6: #{bce_softmax_loss.1} parent=0 // loop_footer
    %s12 = sadd.s32 1, %s8
  $region7: #{bce_softmax_loss.1} parent=0 // loop_footer_branch
    %7 = sbr.rel target = $region3
  $region8: #{bce_softmax_loss.1} parent=0 // loop_exit
    _

</llo_original>
